<compile_context>
chip_gen: v7x
topology: tpu7x:2x2x1
jax: 0.10.0
libtpu: 0.0.40
codegen_flags: <defaults>
</compile_context>

<pallas_src>
import functools
import math

import jax
import jax.numpy as jnp
from jax.experimental import pallas as pl
from jax.experimental.pallas import tpu as pltpu


def _srel_kernel(phi_ref, w_ref, w1sr_ref, w1si_ref, w1w_ref, hv_ref,
                 w2e_ref, b2e_ref, w2r_ref, b2r_ref,
                 phi_opt_ref, eta_out_ref, hs_ref, *, mag):
    """One grid step = one (batch tile i, antenna index m) pair.

    phi_ref:     (TB, Ls)       phi tile for this batch tile
    w_ref:       (1, TB, 2*Lw)  per-(b, m) w features  [w.real | w.imag]
    w1sr/w1si:   (Ls, 2H)       fused first-layer weights, s.real / s.imag rows
    w1w_ref:     (2*Lw, 2H)     fused first-layer weights, w rows
    hv_ref:      (M, 2H)        precomputed v_M[:, m] @ W1_v + [b1e | b1r]
    w2e_ref:     (2H, Ls)       second layer, eta head (rho rows zero-padded)
    b2e_ref:     (1, Ls)
    w2r_ref:     (1, 2H)        rho head second layer as a VPU row (eta cols zero)
    b2r_ref:     (1, 1)         SMEM scalar
    phi_opt_ref: (TB, Ls)       output, resident across the m axis (accumulator)
    eta_out_ref: (1, TB, Ls)    lane-dense eta output slab for (m, tile)
    hs_ref:      (TB, 2H)       VMEM scratch caching the s-contribution
    """
    m = pl.program_id(1)

    @pl.when(m == 0)
    def _init():
        phi = phi_ref[...]
        s_r = mag * jnp.cos(phi)                       # EUP, essentially free
        s_i = mag * jnp.sin(phi)
        hs_ref[...] = (
            jnp.dot(s_r, w1sr_ref[...], preferred_element_type=jnp.float32)
            + jnp.dot(s_i, w1si_ref[...], preferred_element_type=jnp.float32))
        phi_opt_ref[...] = phi

    # Fused first layer (eta | rho heads share one matmul); bias folded into hv.
    h = (jnp.dot(w_ref[0], w1w_ref[...], preferred_element_type=jnp.float32)
         + hs_ref[...]
         + hv_ref[pl.ds(m, 1), :])                     # (TB, 2H)
    h = jnp.maximum(h, 0.0)                            # ReLU

    # eta head: MXU.  rho head: width-1 output -> VPU multiply + lane reduce.
    eta = jnp.dot(h, w2e_ref[...], preferred_element_type=jnp.float32) + b2e_ref[...]
    rho = jnp.sum(h * w2r_ref[...], axis=-1, keepdims=True) + b2r_ref[0, 0]

    eta_out_ref[0] = eta                               # clean lane-dense 2-D store
    phi_opt_ref[...] = phi_opt_ref[...] - rho * eta    # accumulate over m


def srel_forward(phi_batch, w_real, w_imag, v_M, params, *, M, Ls, Lw, Lv,
                 batch_tile=256):
    """Pallas-backed SREL forward.

    phi_batch: (B, Ls) f32, w_real/w_imag: (B, Lw, M) f32, v_M: (Lv, M) f32.
    Returns (phi_optimal_batch (B, Ls), eta_M_batch (B, Ls, M)) as in PyTorch.
    """
    B = phi_batch.shape[0]
    H = params["w1e"].shape[1]
    f32 = jnp.float32

    phi_batch = phi_batch.astype(f32)

    # ---- weight preprocessing (tiny, once per call) ---------------------------
    w1 = jnp.concatenate([params["w1e"], params["w1r"]], axis=1)        # (D_in, 2H)
    b1 = jnp.concatenate([params["b1e"], params["b1r"]], axis=1)        # (1, 2H)
    w1_sr = w1[:Ls]                                                     # (Ls, 2H)
    w1_si = w1[Ls:2 * Ls]                                               # (Ls, 2H)
    w1_w = w1[2 * Ls:2 * Ls + 2 * Lw]                                   # (2Lw, 2H)
    w1_v = w1[2 * Ls + 2 * Lw:]                                         # (Lv, 2H)

    # v_M is batch independent -> its first-layer contribution (+ bias) is a
    # constant (M, 2H) table the kernel indexes by m.
    hv = jnp.transpose(v_M).astype(f32) @ w1_v + b1                     # (M, 2H)

    # Second layer: zero-pad so the fused (TB, 2H) activation feeds both heads
    # without any in-kernel lane slicing.
    w2e_f = jnp.concatenate([params["w2e"], jnp.zeros((H, Ls), f32)], axis=0)    # (2H, Ls)
    w2r_row = jnp.concatenate([jnp.zeros((1, H), f32), params["w2r"].T], axis=1)  # (1, 2H)
    b2e = params["b2e"].astype(f32)                                     # (1, Ls)
    b2r = params["b2r"].astype(f32)                                     # (1, 1)

    # ---- per-(b, m) streamed features: (M, B, 2*Lw), lane-dense last dim ------
    w_cat = jnp.concatenate(
        [jnp.transpose(w_real, (2, 0, 1)), jnp.transpose(w_imag, (2, 0, 1))],
        axis=-1).astype(f32)                                            # (M, B, 2Lw)

    # ---- grid / tiling --------------------------------------------------------
    tb = B if B <= batch_tile else batch_tile       # batch_tile is a multiple of 8
    n_b = pl.cdiv(B, tb)
    grid = (n_b, M)

    mag = 1.0 / math.sqrt(float(Ls))
    kernel = functools.partial(_srel_kernel, mag=mag)

    def _resident(a):
        zeros = (0,) * a.ndim
        return pl.BlockSpec(a.shape, lambda i, m: zeros)

    phi_opt, eta_mbl = pl.pallas_call(
        kernel,
        grid=grid,
        in_specs=[
            pl.BlockSpec((tb, Ls), lambda i, m: (i, 0)),                 # phi
            pl.BlockSpec((1, tb, 2 * Lw), lambda i, m: (m, i, 0)),       # w features
            _resident(w1_sr), _resident(w1_si), _resident(w1_w),
            _resident(hv), _resident(w2e_f), _resident(b2e), _resident(w2r_row),
            pl.BlockSpec(memory_space=pltpu.MemorySpace.SMEM),           # b2r scalar
        ],
        out_specs=(
            pl.BlockSpec((tb, Ls), lambda i, m: (i, 0)),                 # phi_optimal
            pl.BlockSpec((1, tb, Ls), lambda i, m: (m, i, 0)),           # eta (M, B, Ls)
        ),
        out_shape=(
            jax.ShapeDtypeStruct((B, Ls), f32),
            jax.ShapeDtypeStruct((M, B, Ls), f32),
        ),
        scratch_shapes=[pltpu.VMEM((tb, 2 * H), f32)],
        compiler_params=pltpu.CompilerParams(
            dimension_semantics=("parallel", "arbitrary"),
            vmem_limit_bytes=32 * 1024 * 1024,
        ),
    )(phi_batch, w_cat, w1_sr, w1_si, w1_w, hv, w2e_f, b2e, w2r_row, b2r)

    # PyTorch output layout: eta_M_batch[b, :, m]  (cheap XLA-side transpose).
    eta_M_batch = jnp.transpose(eta_mbl, (1, 2, 0))                     # (B, Ls, M)
    return phi_opt, eta_M_batch


def _init_params(key, D_in, hidden, Ls):
    """Deterministic small-uniform init for the two assumed 2-layer MLPs."""
    ks = jax.random.split(key, 8)

    def lin(k, fan_in, fan_out):
        lim = 1.0 / jnp.sqrt(jnp.float32(fan_in))
        return jax.random.uniform(k, (fan_in, fan_out), jnp.float32, -lim, lim)

    return {
        # Estimate_eta: D_in -> hidden -> Ls
        "w1e": lin(ks[0], D_in, hidden),
        "b1e": jax.random.uniform(ks[1], (1, hidden), jnp.float32, -0.1, 0.1),
        "w2e": lin(ks[2], hidden, Ls),
        "b2e": jax.random.uniform(ks[3], (1, Ls), jnp.float32, -0.1, 0.1),
        # Estimate_rho: D_in -> hidden -> 1
        "w1r": lin(ks[4], D_in, hidden),
        "b1r": jax.random.uniform(ks[5], (1, hidden), jnp.float32, -0.1, 0.1),
        "w2r": lin(ks[6], hidden, 1),
        "b2r": jax.random.uniform(ks[7], (1, 1), jnp.float32, -0.1, 0.1),
    }


def _reference_forward(phi_batch, w_real, w_imag, v_M, params, *, M, Ls, Lw, Lv):
    """Pure-JAX reference mirroring the PyTorch loops (sanity check)."""
    B = phi_batch.shape[0]
    mag = 1.0 / jnp.sqrt(jnp.float32(Ls))
    phi_opt = jnp.zeros_like(phi_batch)
    eta_M_batch = jnp.zeros((B, Ls, M), jnp.float32)
    for i in range(B):
        s_r = mag * jnp.cos(phi_batch[i])
        s_i = mag * jnp.sin(phi_batch[i])
        eta_M = jnp.zeros((Ls, M), jnp.float32)
        rho_M = jnp.zeros((M,), jnp.float32)
        for m in range(M):
            xx = jnp.concatenate(
                [s_r, s_i, w_real[i, :, m], w_imag[i, :, m], v_M[:, m]])
            he = jnp.maximum(xx @ params["w1e"] + params["b1e"][0], 0.0)
            ee = he @ params["w2e"] + params["b2e"][0]
            hr = jnp.maximum(xx @ params["w1r"] + params["b1r"][0], 0.0)
            rr = (hr @ params["w2r"] + params["b2r"][0])[0]
            eta_M = eta_M.at[:, m].set(ee)
            rho_M = rho_M.at[m].set(rr)
        eta = jnp.sum(rho_M[None, :] * eta_M, axis=1)
        phi_opt = phi_opt.at[i].set(phi_batch[i] - eta)
        eta_M_batch = eta_M_batch.at[i].set(eta_M)
    return phi_opt, eta_M_batch


if __name__ == "__main__":
    # constants: M, Nt, N, Lw, Lv
    constants = {"M": 4, "Nt": 2, "N": 4, "Lw": 8, "Lv": 8}
    M = constants["M"]
    Ls = constants["Nt"] * constants["N"]        # 8
    Lw, Lv = constants["Lw"], constants["Lv"]
    D_in = 2 * Ls + 2 * Lw + Lv                  # 40
    hidden = 32
    B = 2

    key = jax.random.PRNGKey(0)
    k_phi, k_wr, k_wi, k_v, k_p = jax.random.split(key, 5)

    phi_batch = jax.random.uniform(k_phi, (B, Ls), jnp.float32, -jnp.pi, jnp.pi)
    w_real = jax.random.normal(k_wr, (B, Lw, M), jnp.float32)
    w_imag = jax.random.normal(k_wi, (B, Lw, M), jnp.float32)
    v_M = jax.random.normal(k_v, (Lv, M), jnp.float32)

    params = _init_params(k_p, D_in, hidden, Ls)

    fwd = jax.jit(functools.partial(srel_forward, M=M, Ls=Ls, Lw=Lw, Lv=Lv))
    phi_opt, eta_m = fwd(phi_batch, w_real, w_imag, v_M, params)
    jax.block_until_ready((phi_opt, eta_m))

    # quiet correctness check against the loop-for-loop reference
    ref_phi, ref_eta = _reference_forward(
        phi_batch, w_real, w_imag, v_M, params, M=M, Ls=Ls, Lw=Lw, Lv=Lv)
    assert jnp.allclose(phi_opt, ref_phi, atol=1e-4, rtol=1e-4)
    assert jnp.allclose(eta_m, ref_eta, atol=1e-4, rtol=1e-4)

    print("KERNEL_OK")
</pallas_src>

<mosaic_0001>
module attributes {stable_mosaic.version = 11 : i64} {
  func.func @_srel_kernel(%arg0: i32, %arg1: i32, %arg2: memref<2x8xf32, #tpu.memory_space<vmem>>, %arg3: memref<1x2x16xf32, #tpu.memory_space<vmem>>, %arg4: memref<8x64xf32, #tpu.memory_space<vmem>>, %arg5: memref<8x64xf32, #tpu.memory_space<vmem>>, %arg6: memref<16x64xf32, #tpu.memory_space<vmem>>, %arg7: memref<4x64xf32, #tpu.memory_space<vmem>>, %arg8: memref<64x8xf32, #tpu.memory_space<vmem>>, %arg9: memref<1x8xf32, #tpu.memory_space<vmem>>, %arg10: memref<1x64xf32, #tpu.memory_space<vmem>>, %arg11: memref<1x1xf32, #tpu.memory_space<smem>>, %arg12: memref<2x8xf32, #tpu.memory_space<vmem>>, %arg13: memref<1x2x8xf32, #tpu.memory_space<vmem>>, %arg14: memref<2x64xf32, #tpu.memory_space<vmem>>) attributes {dimension_semantics = [#tpu.dimension_semantics<parallel>, #tpu.dimension_semantics<arbitrary>], iteration_bounds = array<i64: 1, 4>, scalar_prefetch = 0 : i64, scratch_operands = 1 : i64, tpu.core_type = #tpu.core_type<tc>, window_params = [{transform_indices = @transform_0, window_bounds = array<i64: 2, 8>}, {transform_indices = @transform_1, window_bounds = array<i64: 1, 2, 16>}, {pipeline_mode = #tpu.pipeline_mode<synchronous>, transform_indices = @transform_2, window_bounds = array<i64: 8, 64>}, {pipeline_mode = #tpu.pipeline_mode<synchronous>, transform_indices = @transform_3, window_bounds = array<i64: 8, 64>}, {pipeline_mode = #tpu.pipeline_mode<synchronous>, transform_indices = @transform_4, window_bounds = array<i64: 16, 64>}, {pipeline_mode = #tpu.pipeline_mode<synchronous>, transform_indices = @transform_5, window_bounds = array<i64: 4, 64>}, {pipeline_mode = #tpu.pipeline_mode<synchronous>, transform_indices = @transform_6, window_bounds = array<i64: 64, 8>}, {pipeline_mode = #tpu.pipeline_mode<synchronous>, transform_indices = @transform_7, window_bounds = array<i64: 1, 8>}, {pipeline_mode = #tpu.pipeline_mode<synchronous>, transform_indices = @transform_8, window_bounds = array<i64: 1, 64>}, {transform_indices = @transform_9, window_bounds = array<i64: 1, 1>}, {transform_indices = @transform_10, window_bounds = array<i64: 2, 8>}, {transform_indices = @transform_11, window_bounds = array<i64: 1, 2, 8>}]} {
    %c0_i32 = arith.constant 0 : i32
    %0 = arith.cmpi eq, %arg1, %c0_i32 : i32
    %1 = arith.extui %0 : i1 to i32
    %c0_i32_0 = arith.constant 0 : i32
    %2 = arith.cmpi ne, %1, %c0_i32_0 : i32
    scf.if %2 {
      %c0_26 = arith.constant 0 : index
      %c0_27 = arith.constant 0 : index
      %36 = vector.load %arg2[%c0_26, %c0_27] : memref<2x8xf32, #tpu.memory_space<vmem>>, vector<2x8xf32>
      %37 = math.cos %36 : vector<2x8xf32>
      %cst_28 = arith.constant 0.353553385 : f32
      %38 = vector.broadcast %cst_28 : f32 to vector<2x8xf32>
      %39 = arith.mulf %38, %37 : vector<2x8xf32>
      %40 = math.sin %36 : vector<2x8xf32>
      %cst_29 = arith.constant 0.353553385 : f32
      %41 = vector.broadcast %cst_29 : f32 to vector<2x8xf32>
      %42 = arith.mulf %41, %40 : vector<2x8xf32>
      %c0_30 = arith.constant 0 : index
      %c0_31 = arith.constant 0 : index
      %43 = vector.load %arg4[%c0_30, %c0_31] : memref<8x64xf32, #tpu.memory_space<vmem>>, vector<8x64xf32>
      %cst_32 = arith.constant dense<0.000000e+00> : vector<2x64xf32>
      %44 = tpu.matmul %39, %43, %cst_32 {dimension_numbers = #tpu.dot_dimension_numbers<[1], [0], [0], [1], [0, 0, 1, 1], [], []>} : vector<2x8xf32>, vector<8x64xf32>, vector<2x64xf32> -> vector<2x64xf32>
      %c0_33 = arith.constant 0 : index
      %c0_34 = arith.constant 0 : index
      %45 = vector.load %arg5[%c0_33, %c0_34] : memref<8x64xf32, #tpu.memory_space<vmem>>, vector<8x64xf32>
      %cst_35 = arith.constant dense<0.000000e+00> : vector<2x64xf32>
      %46 = tpu.matmul %42, %45, %cst_35 {dimension_numbers = #tpu.dot_dimension_numbers<[1], [0], [0], [1], [0, 0, 1, 1], [], []>} : vector<2x8xf32>, vector<8x64xf32>, vector<2x64xf32> -> vector<2x64xf32>
      %47 = arith.addf %44, %46 : vector<2x64xf32>
      %c0_36 = arith.constant 0 : index
      %c0_37 = arith.constant 0 : index
      %48 = vector.load %arg14[%c0_36, %c0_37] : memref<2x64xf32, #tpu.memory_space<vmem>>, vector<2x64xf32>
      tpu.vector_store %arg14[%c0_36, %c0_37], %47 {strides = array<i32>} : memref<2x64xf32, #tpu.memory_space<vmem>>, vector<2x64xf32>,
      %c0_38 = arith.constant 0 : index
      %c0_39 = arith.constant 0 : index
      %49 = vector.load %arg12[%c0_38, %c0_39] : memref<2x8xf32, #tpu.memory_space<vmem>>, vector<2x8xf32>
      tpu.vector_store %arg12[%c0_38, %c0_39], %36 {strides = array<i32>} : memref<2x8xf32, #tpu.memory_space<vmem>>, vector<2x8xf32>,
    } else {
    }
    %c0 = arith.constant 0 : index
    %c0_1 = arith.constant 0 : index
    %c0_2 = arith.constant 0 : index
    %3 = vector.load %arg3[%c0, %c0_1, %c0_2] : memref<1x2x16xf32, #tpu.memory_space<vmem>>, vector<1x2x16xf32>
    %4 = vector.shape_cast %3 : vector<1x2x16xf32> to vector<2x16xf32>
    %c0_3 = arith.constant 0 : index
    %c0_4 = arith.constant 0 : index
    %5 = vector.load %arg6[%c0_3, %c0_4] : memref<16x64xf32, #tpu.memory_space<vmem>>, vector<16x64xf32>
    %cst = arith.constant dense<0.000000e+00> : vector<2x64xf32>
    %6 = tpu.matmul %4, %5, %cst {dimension_numbers = #tpu.dot_dimension_numbers<[1], [0], [0], [1], [0, 0, 1, 1], [], []>} : vector<2x16xf32>, vector<16x64xf32>, vector<2x64xf32> -> vector<2x64xf32>
    %c0_5 = arith.constant 0 : index
    %c0_6 = arith.constant 0 : index
    %7 = vector.load %arg14[%c0_5, %c0_6] : memref<2x64xf32, #tpu.memory_space<vmem>>, vector<2x64xf32>
    %8 = arith.addf %6, %7 : vector<2x64xf32>
    %9 = arith.index_cast %arg1 : i32 to index
    %c0_7 = arith.constant 0 : index
    %10 = vector.load %arg7[%9, %c0_7] : memref<4x64xf32, #tpu.memory_space<vmem>>, vector<1x64xf32>
    %11 = vector.broadcast %10 : vector<1x64xf32> to vector<2x64xf32>
    %12 = arith.addf %8, %11 : vector<2x64xf32>
    %cst_8 = arith.constant 0.000000e+00 : f32
    %13 = vector.broadcast %cst_8 : f32 to vector<2x64xf32>
    %14 = arith.maximumf %12, %13 : vector<2x64xf32>
    %c0_9 = arith.constant 0 : index
    %c0_10 = arith.constant 0 : index
    %15 = vector.load %arg8[%c0_9, %c0_10] : memref<64x8xf32, #tpu.memory_space<vmem>>, vector<64x8xf32>
    %cst_11 = arith.constant dense<0.000000e+00> : vector<2x8xf32>
    %16 = tpu.matmul %14, %15, %cst_11 {dimension_numbers = #tpu.dot_dimension_numbers<[1], [0], [0], [1], [0, 0, 1, 1], [], []>} : vector<2x64xf32>, vector<64x8xf32>, vector<2x8xf32> -> vector<2x8xf32>
    %c0_12 = arith.constant 0 : index
    %c0_13 = arith.constant 0 : index
    %17 = vector.load %arg9[%c0_12, %c0_13] : memref<1x8xf32, #tpu.memory_space<vmem>>, vector<1x8xf32>
    %18 = vector.broadcast %17 : vector<1x8xf32> to vector<2x8xf32>
    %19 = arith.addf %16, %18 : vector<2x8xf32>
    %c0_14 = arith.constant 0 : index
    %c0_15 = arith.constant 0 : index
    %20 = vector.load %arg10[%c0_14, %c0_15] : memref<1x64xf32, #tpu.memory_space<vmem>>, vector<1x64xf32>
    %21 = vector.broadcast %20 : vector<1x64xf32> to vector<2x64xf32>
    %22 = arith.mulf %14, %21 : vector<2x64xf32>
    %cst_16 = arith.constant dense<0.000000e+00> : vector<2xf32>
    %23 = vector.multi_reduction <add>, %22, %cst_16 [1] : vector<2x64xf32> to vector<2xf32>
    %24 = vector.shape_cast %23 : vector<2xf32> to vector<2x1xf32>
    %c0_17 = arith.constant 0 : index
    %c0_18 = arith.constant 0 : index
    %25 = memref.load %arg11[%c0_17, %c0_18] : memref<1x1xf32, #tpu.memory_space<smem>>
    %26 = vector.broadcast %25 : f32 to vector<2x1xf32>
    %27 = arith.addf %24, %26 : vector<2x1xf32>
    %c0_19 = arith.constant 0 : index
    %c0_20 = arith.constant 0 : index
    %c0_21 = arith.constant 0 : index
    %28 = vector.load %arg13[%c0_19, %c0_20, %c0_21] : memref<1x2x8xf32, #tpu.memory_space<vmem>>, vector<1x2x8xf32>
    %29 = vector.shape_cast %28 : vector<1x2x8xf32> to vector<2x8xf32>
    %30 = vector.shape_cast %19 : vector<2x8xf32> to vector<1x2x8xf32>
    tpu.vector_store %arg13[%c0_19, %c0_20, %c0_21], %30 {strides = array<i32>} : memref<1x2x8xf32, #tpu.memory_space<vmem>>, vector<1x2x8xf32>,
    %c0_22 = arith.constant 0 : index
    %c0_23 = arith.constant 0 : index
    %31 = vector.load %arg12[%c0_22, %c0_23] : memref<2x8xf32, #tpu.memory_space<vmem>>, vector<2x8xf32>
    %32 = vector.broadcast %27 : vector<2x1xf32> to vector<2x8xf32>
    %33 = arith.mulf %32, %19 : vector<2x8xf32>
    %34 = arith.subf %31, %33 : vector<2x8xf32>
    %c0_24 = arith.constant 0 : index
    %c0_25 = arith.constant 0 : index
    %35 = vector.load %arg12[%c0_24, %c0_25] : memref<2x8xf32, #tpu.memory_space<vmem>>, vector<2x8xf32>
    tpu.vector_store %arg12[%c0_24, %c0_25], %34 {strides = array<i32>} : memref<2x8xf32, #tpu.memory_space<vmem>>, vector<2x8xf32>,
    return
  }
  func.func @transform_0(%arg0: i32, %arg1: i32) -> (i32, i32) {
    %c0_i32 = arith.constant 0 : i32
    %c0_i32_0 = arith.constant 0 : i32
    return %arg0, %c0_i32 : i32, i32
  }
  func.func @transform_1(%arg0: i32, %arg1: i32) -> (i32, i32, i32) {
    %c0_i32 = arith.constant 0 : i32
    %c0_i32_0 = arith.constant 0 : i32
    return %arg1, %arg0, %c0_i32 : i32, i32, i32
  }
  func.func @transform_2(%arg0: i32, %arg1: i32) -> (i32, i32) {
    %c0_i32 = arith.constant 0 : i32
    %c0_i32_0 = arith.constant 0 : i32
    %c0_i32_1 = arith.constant 0 : i32
    return %c0_i32, %c0_i32_0 : i32, i32
  }
  func.func @transform_3(%arg0: i32, %arg1: i32) -> (i32, i32) {
    %c0_i32 = arith.constant 0 : i32
    %c0_i32_0 = arith.constant 0 : i32
    %c0_i32_1 = arith.constant 0 : i32
    return %c0_i32, %c0_i32_0 : i32, i32
  }
  func.func @transform_4(%arg0: i32, %arg1: i32) -> (i32, i32) {
    %c0_i32 = arith.constant 0 : i32
    %c0_i32_0 = arith.constant 0 : i32
    %c0_i32_1 = arith.constant 0 : i32
    return %c0_i32, %c0_i32_0 : i32, i32
  }
  func.func @transform_5(%arg0: i32, %arg1: i32) -> (i32, i32) {
    %c0_i32 = arith.constant 0 : i32
    %c0_i32_0 = arith.constant 0 : i32
    %c0_i32_1 = arith.constant 0 : i32
    return %c0_i32, %c0_i32_0 : i32, i32
  }
  func.func @transform_6(%arg0: i32, %arg1: i32) -> (i32, i32) {
    %c0_i32 = arith.constant 0 : i32
    %c0_i32_0 = arith.constant 0 : i32
    %c0_i32_1 = arith.constant 0 : i32
    return %c0_i32, %c0_i32_0 : i32, i32
  }
  func.func @transform_7(%arg0: i32, %arg1: i32) -> (i32, i32) {
    %c0_i32 = arith.constant 0 : i32
    %c0_i32_0 = arith.constant 0 : i32
    %c0_i32_1 = arith.constant 0 : i32
    return %c0_i32, %c0_i32_0 : i32, i32
  }
  func.func @transform_8(%arg0: i32, %arg1: i32) -> (i32, i32) {
    %c0_i32 = arith.constant 0 : i32
    %c0_i32_0 = arith.constant 0 : i32
    %c0_i32_1 = arith.constant 0 : i32
    return %c0_i32, %c0_i32_0 : i32, i32
  }
  func.func @transform_9(%arg0: i32, %arg1: i32) -> (i32, i32) {
    %c0_i32 = arith.constant 0 : i32
    %c0_i32_0 = arith.constant 0 : i32
    %c0_i32_1 = arith.constant 0 : i32
    return %c0_i32, %c0_i32_0 : i32, i32
  }
  func.func @transform_10(%arg0: i32, %arg1: i32) -> (i32, i32) {
    %c0_i32 = arith.constant 0 : i32
    %c0_i32_0 = arith.constant 0 : i32
    return %arg0, %c0_i32 : i32, i32
  }
  func.func @transform_11(%arg0: i32, %arg1: i32) -> (i32, i32, i32) {
    %c0_i32 = arith.constant 0 : i32
    %c0_i32_0 = arith.constant 0 : i32
    return %arg1, %arg0, %c0_i32 : i32, i32, i32
  }
}

</mosaic_0001>

<llo_original>
// kernel: srel_forward.1
$region0: #{srel_forward.1}
  #allocation0 [shape = 'u32[]', space=smem, size = 0x4, offset = 0x4, fixed_abs, tag = 'smem constant byte address 0x4 - core index']
  #allocation1 [shape = 'u32[144,128]{1,0:T(1,128)}', space=vmem, size = 0x12000, scoped, tag = 'internal scratch']
  #allocation2 [shape = 'f32[2,64]{1,0:T(2,128)}', space=vmem, size = 0x400, scoped, tag = 'scratch operand']
  #allocation3 [shape = 'f32[1,1]{1,0:T(1,128)S(6)}', space=smem, size = 0x200, scoped, tag = 'scoped memory for srel_forward.1']
  %s0 = inlined_call_operand.vmem [shape: f32[2,8], index: 0, kind: input, shape index: {}]
  %s1 = inlined_call_operand.vmem [shape: f32[4,2,16], index: 1, kind: input, shape index: {}]
  %s2 = inlined_call_operand.vmem [shape: f32[8,64], index: 2, kind: input, shape index: {}]
  %s3 = inlined_call_operand.vmem [shape: f32[8,64], index: 3, kind: input, shape index: {}]
  %s4 = inlined_call_operand.vmem [shape: f32[16,64], index: 4, kind: input, shape index: {}]
  %s5 = inlined_call_operand.vmem [shape: f32[4,64], index: 5, kind: input, shape index: {}]
  %s6 = inlined_call_operand.vmem [shape: f32[64,8], index: 6, kind: input, shape index: {}]
  %s7 = inlined_call_operand.vmem [shape: f32[1,8], index: 7, kind: input, shape index: {}]
  %s8 = inlined_call_operand.vmem [shape: f32[1,64], index: 8, kind: input, shape index: {}]
  %s9 = inlined_call_operand.<no memory space> [shape: f32[1,1], index: 9, kind: input, shape index: {}]
  %s10 = inlined_call_operand.hbm [shape: f32[2,8], index: 10, kind: output, shape index: {0}]
  %s11 = inlined_call_operand.vmem [shape: f32[4,2,8], index: 11, kind: output, shape index: {1}]
  %12 = xla_tuple %s10, %s11
  %s13 = sld [smem:[#allocation0]]
  $region85: #{srel_forward.1} parent=0
    _
  %s15 = ssub.s32 1, %s13
  %s16 = scalar_select 0, %s15, %s13
  %17 = sst [smem:[#allocation3]] %s9
  $region1: #{srel_forward.1} parent=0
    #allocation4 [shape = 'u8[1024]{0}', space=vmem, size = 0x400, scoped, tag = 'output window, operand 0, single buffered']
    #allocation5 [shape = 's32[2]{0}', space=sflag, size = 0x8, scoped, tag = 'scoped memory for srel_forward.1']
    %18 = vsyncpa [#allocation5], 0
    loop: start=0, step=1, limit=6
    $region2: #{srel_forward.1} parent=1 // loop_pre_header
      _
    $region3: #{srel_forward.1} parent=1 // loop_header
      %s20 = sphi 0, %s24
      %p21 = scmp.ge.s32.totalorder %s20, 6
      %s27 = sphi 0, %s39
      %s28 = sphi 0, %s35
      %s29 = sphi 0, %s27
      %s30 = sphi 0, %s28
      %s31 = sphi 0, %s29
      %s32 = sphi 0, %s30
      %s42 = sphi 0, %s44
      %s45 = sphi 0, %s42
      %s46 = sphi 0, %s45
      %s62 = sphi 0, %s46
      %s70 = sphi 0, %s72
      %s73 = sphi 0, %s70
      %s74 = sphi 0, %s73
      %s90 = sphi 0, %s74
      %s94 = sphi 0, %s94
      %s96 = sphi 0, %s94
      %s97 = sphi 0, %s96
      %s111 = sphi 0, %s97
      %s115 = sphi 0, %s115
      %s117 = sphi 0, %s115
      %s118 = sphi 0, %s117
      %s132 = sphi 0, %s118
      %s136 = sphi 0, %s136
      %s138 = sphi 0, %s136
      %s139 = sphi 0, %s138
      %s153 = sphi 0, %s139
      %s157 = sphi 0, %s157
      %s159 = sphi 0, %s157
      %s160 = sphi 0, %s159
      %s174 = sphi 0, %s160
      %s178 = sphi 0, %s178
      %s180 = sphi 0, %s178
      %s181 = sphi 0, %s180
      %s195 = sphi 0, %s181
      %s199 = sphi 0, %s199
      %s201 = sphi 0, %s199
      %s202 = sphi 0, %s201
      %s216 = sphi 0, %s202
      %s220 = sphi 0, %s220
      %s222 = sphi 0, %s220
      %s223 = sphi 0, %s222
      %s237 = sphi 0, %s223
      %s241 = sphi 0, %s241
      %s243 = sphi 0, %s241
      %s244 = sphi 0, %s243
      %s258 = sphi 0, %s244
      %s264 = sphi 0, %s266
      %s267 = sphi 0, %s264
      %s268 = sphi 0, %s267
      %s284 = sphi 0, %s268
      %s292 = sphi 0, %s294
      %s295 = sphi 0, %s292
      %s296 = sphi 0, %s295
      %s312 = sphi 0, %s296
    $region4: #{srel_forward.1} parent=1 // loop_header_branch
      %23 = sbr.rel (%p21) target = $region8
    $region5: #{srel_forward.1} parent=1 // loop_body
      %s25 = ssub.s32 %s20, 1
      %s26 = ssub.s32 %s20, 2
      %s33 = sadd.s32 1, %s28
      %p34 = scmp.ge.s32.totalorder %s33, 4
      %s35 = scalar_select %p34, 0, %s33
      %s36 = sadd.s32 1, %s27
      %s37 = scalar_select %p34, %s36, %s27
      %p38 = scmp.ge.s32.totalorder %s37, 1
      %s39 = scalar_select %p38, 0, %s37
      %s40 = ssub.s32 %s27, %s39
      %p41 = scmp.eq.s32.totalorder %s40, 0
      %s43 = sadd.s32 %s42, 1
      %s44 = scalar_select %p41, %s42, %s43
      %p47 = pneg %p41
      %p48 = scmp.eq.s32.totalorder %s20, 3
      %p49 = por %p47, %p48
      %p50 = scmp.ne.s32.totalorder %s42, %s45
      %p51 = scmp.eq.s32.totalorder %s20, 0
      %p52 = por %p50, %p51
      %p53 = scmp.ne.s32.totalorder %s42, %s45
      %p54 = scmp.eq.s32.totalorder %s25, 3
      %p55 = por %p53, %p54
      %p56 = scmp.ne.s32.totalorder %s45, %s46
      %p57 = scmp.eq.s32.totalorder %s25, 0
      %p58 = por %p56, %p57
      %p59 = scmp.ne.s32.totalorder %s45, %s46
      %p60 = scmp.eq.s32.totalorder %s26, 3
      %p61 = por %p59, %p60
      %p63 = scmp.ne.s32.totalorder %s46, %s62
      %p64 = scmp.eq.s32.totalorder %s26, 0
      %p65 = por %p63, %p64
      %s66 = ssub.s32 %s28, %s35
      %s67 = ssub.s32 %s27, %s39
      %s68 = sor.u32 %s66, %s67
      %p69 = scmp.eq.s32.totalorder %s68, 0
      %s71 = sadd.s32 %s70, 1
      %s72 = scalar_select %p69, %s70, %s71
      %p75 = pneg %p69
      %p76 = scmp.eq.s32.totalorder %s20, 3
      %p77 = por %p75, %p76
      %p78 = scmp.ne.s32.totalorder %s70, %s73
      %p79 = scmp.eq.s32.totalorder %s20, 0
      %p80 = por %p78, %p79
      %p81 = scmp.ne.s32.totalorder %s70, %s73
      %p82 = scmp.eq.s32.totalorder %s25, 3
      %p83 = por %p81, %p82
      %p84 = scmp.ne.s32.totalorder %s73, %s74
      %p85 = scmp.eq.s32.totalorder %s25, 0
      %p86 = por %p84, %p85
      %p87 = scmp.ne.s32.totalorder %s73, %s74
      %p88 = scmp.eq.s32.totalorder %s26, 3
      %p89 = por %p87, %p88
      %p91 = scmp.ne.s32.totalorder %s74, %s90
      %p92 = scmp.eq.s32.totalorder %s26, 0
      %p93 = por %p91, %p92
      %s95 = sadd.s32 %s94, 1
      %p98 = scmp.eq.s32.totalorder %s20, 3
      %p99 = scmp.ne.s32.totalorder %s94, %s96
      %p100 = scmp.eq.s32.totalorder %s20, 0
      %p101 = por %p99, %p100
      %p102 = scmp.ne.s32.totalorder %s94, %s96
      %p103 = scmp.eq.s32.totalorder %s25, 3
      %p104 = por %p102, %p103
      %p105 = scmp.ne.s32.totalorder %s96, %s97
      %p106 = scmp.eq.s32.totalorder %s25, 0
      %p107 = por %p105, %p106
      %p108 = scmp.ne.s32.totalorder %s96, %s97
      %p109 = scmp.eq.s32.totalorder %s26, 3
      %p110 = por %p108, %p109
      %p112 = scmp.ne.s32.totalorder %s97, %s111
      %p113 = scmp.eq.s32.totalorder %s26, 0
      %p114 = por %p112, %p113
      %s116 = sadd.s32 %s115, 1
      %p119 = scmp.eq.s32.totalorder %s20, 3
      %p120 = scmp.ne.s32.totalorder %s115, %s117
      %p121 = scmp.eq.s32.totalorder %s20, 0
      %p122 = por %p120, %p121
      %p123 = scmp.ne.s32.totalorder %s115, %s117
      %p124 = scmp.eq.s32.totalorder %s25, 3
      %p125 = por %p123, %p124
      %p126 = scmp.ne.s32.totalorder %s117, %s118
      %p127 = scmp.eq.s32.totalorder %s25, 0
      %p128 = por %p126, %p127
      %p129 = scmp.ne.s32.totalorder %s117, %s118
      %p130 = scmp.eq.s32.totalorder %s26, 3
      %p131 = por %p129, %p130
      %p133 = scmp.ne.s32.totalorder %s118, %s132
      %p134 = scmp.eq.s32.totalorder %s26, 0
      %p135 = por %p133, %p134
      %s137 = sadd.s32 %s136, 1
      %p140 = scmp.eq.s32.totalorder %s20, 3
      %p141 = scmp.ne.s32.totalorder %s136, %s138
      %p142 = scmp.eq.s32.totalorder %s20, 0
      %p143 = por %p141, %p142
      %p144 = scmp.ne.s32.totalorder %s136, %s138
      %p145 = scmp.eq.s32.totalorder %s25, 3
      %p146 = por %p144, %p145
      %p147 = scmp.ne.s32.totalorder %s138, %s139
      %p148 = scmp.eq.s32.totalorder %s25, 0
      %p149 = por %p147, %p148
      %p150 = scmp.ne.s32.totalorder %s138, %s139
      %p151 = scmp.eq.s32.totalorder %s26, 3
      %p152 = por %p150, %p151
      %p154 = scmp.ne.s32.totalorder %s139, %s153
      %p155 = scmp.eq.s32.totalorder %s26, 0
      %p156 = por %p154, %p155
      %s158 = sadd.s32 %s157, 1
      %p161 = scmp.eq.s32.totalorder %s20, 3
      %p162 = scmp.ne.s32.totalorder %s157, %s159
      %p163 = scmp.eq.s32.totalorder %s20, 0
      %p164 = por %p162, %p163
      %p165 = scmp.ne.s32.totalorder %s157, %s159
      %p166 = scmp.eq.s32.totalorder %s25, 3
      %p167 = por %p165, %p166
      %p168 = scmp.ne.s32.totalorder %s159, %s160
      %p169 = scmp.eq.s32.totalorder %s25, 0
      %p170 = por %p168, %p169
      %p171 = scmp.ne.s32.totalorder %s159, %s160
      %p172 = scmp.eq.s32.totalorder %s26, 3
      %p173 = por %p171, %p172
      %p175 = scmp.ne.s32.totalorder %s160, %s174
      %p176 = scmp.eq.s32.totalorder %s26, 0
      %p177 = por %p175, %p176
      %s179 = sadd.s32 %s178, 1
      %p182 = scmp.eq.s32.totalorder %s20, 3
      %p183 = scmp.ne.s32.totalorder %s178, %s180
      %p184 = scmp.eq.s32.totalorder %s20, 0
      %p185 = por %p183, %p184
      %p186 = scmp.ne.s32.totalorder %s178, %s180
      %p187 = scmp.eq.s32.totalorder %s25, 3
      %p188 = por %p186, %p187
      %p189 = scmp.ne.s32.totalorder %s180, %s181
      %p190 = scmp.eq.s32.totalorder %s25, 0
      %p191 = por %p189, %p190
      %p192 = scmp.ne.s32.totalorder %s180, %s181
      %p193 = scmp.eq.s32.totalorder %s26, 3
      %p194 = por %p192, %p193
      %p196 = scmp.ne.s32.totalorder %s181, %s195
      %p197 = scmp.eq.s32.totalorder %s26, 0
      %p198 = por %p196, %p197
      %s200 = sadd.s32 %s199, 1
      %p203 = scmp.eq.s32.totalorder %s20, 3
      %p204 = scmp.ne.s32.totalorder %s199, %s201
      %p205 = scmp.eq.s32.totalorder %s20, 0
      %p206 = por %p204, %p205
      %p207 = scmp.ne.s32.totalorder %s199, %s201
      %p208 = scmp.eq.s32.totalorder %s25, 3
      %p209 = por %p207, %p208
      %p210 = scmp.ne.s32.totalorder %s201, %s202
      %p211 = scmp.eq.s32.totalorder %s25, 0
      %p212 = por %p210, %p211
      %p213 = scmp.ne.s32.totalorder %s201, %s202
      %p214 = scmp.eq.s32.totalorder %s26, 3
      %p215 = por %p213, %p214
      %p217 = scmp.ne.s32.totalorder %s202, %s216
      %p218 = scmp.eq.s32.totalorder %s26, 0
      %p219 = por %p217, %p218
      %s221 = sadd.s32 %s220, 1
      %p224 = scmp.eq.s32.totalorder %s20, 3
      %p225 = scmp.ne.s32.totalorder %s220, %s222
      %p226 = scmp.eq.s32.totalorder %s20, 0
      %p227 = por %p225, %p226
      %p228 = scmp.ne.s32.totalorder %s220, %s222
      %p229 = scmp.eq.s32.totalorder %s25, 3
      %p230 = por %p228, %p229
      %p231 = scmp.ne.s32.totalorder %s222, %s223
      %p232 = scmp.eq.s32.totalorder %s25, 0
      %p233 = por %p231, %p232
      %p234 = scmp.ne.s32.totalorder %s222, %s223
      %p235 = scmp.eq.s32.totalorder %s26, 3
      %p236 = por %p234, %p235
      %p238 = scmp.ne.s32.totalorder %s223, %s237
      %p239 = scmp.eq.s32.totalorder %s26, 0
      %p240 = por %p238, %p239
      %s242 = sadd.s32 %s241, 1
      %p245 = scmp.eq.s32.totalorder %s20, 3
      %p246 = scmp.ne.s32.totalorder %s241, %s243
      %p247 = scmp.eq.s32.totalorder %s20, 0
      %p248 = por %p246, %p247
      %p249 = scmp.ne.s32.totalorder %s241, %s243
      %p250 = scmp.eq.s32.totalorder %s25, 3
      %p251 = por %p249, %p250
      %p252 = scmp.ne.s32.totalorder %s243, %s244
      %p253 = scmp.eq.s32.totalorder %s25, 0
      %p254 = por %p252, %p253
      %p255 = scmp.ne.s32.totalorder %s243, %s244
      %p256 = scmp.eq.s32.totalorder %s26, 3
      %p257 = por %p255, %p256
      %p259 = scmp.ne.s32.totalorder %s244, %s258
      %p260 = scmp.eq.s32.totalorder %s26, 0
      %p261 = por %p259, %p260
      %s262 = ssub.s32 %s27, %s39
      %p263 = scmp.eq.s32.totalorder %s262, 0
      %s265 = sadd.s32 %s264, 1
      %s266 = scalar_select %p263, %s264, %s265
      %p269 = pneg %p263
      %p270 = scmp.eq.s32.totalorder %s20, 3
      %p271 = por %p269, %p270
      %p272 = scmp.ne.s32.totalorder %s264, %s267
      %p273 = scmp.eq.s32.totalorder %s20, 0
      %p274 = por %p272, %p273
      %p275 = scmp.ne.s32.totalorder %s264, %s267
      %p276 = scmp.eq.s32.totalorder %s25, 3
      %p277 = por %p275, %p276
      %p278 = scmp.ne.s32.totalorder %s267, %s268
      %p279 = scmp.eq.s32.totalorder %s25, 0
      %p280 = por %p278, %p279
      %p281 = scmp.ne.s32.totalorder %s267, %s268
      %p282 = scmp.eq.s32.totalorder %s26, 3
      %p283 = por %p281, %p282
      %p285 = scmp.ne.s32.totalorder %s268, %s284
      %p286 = scmp.eq.s32.totalorder %s26, 0
      %p287 = por %p285, %p286
      %s288 = ssub.s32 %s28, %s35
      %s289 = ssub.s32 %s27, %s39
      %s290 = sor.u32 %s288, %s289
      %p291 = scmp.eq.s32.totalorder %s290, 0
      %s293 = sadd.s32 %s292, 1
      %s294 = scalar_select %p291, %s292, %s293
      %p297 = pneg %p291
      %p298 = scmp.eq.s32.totalorder %s20, 3
      %p299 = por %p297, %p298
      %p300 = scmp.ne.s32.totalorder %s292, %s295
      %p301 = scmp.eq.s32.totalorder %s20, 0
      %p302 = por %p300, %p301
      %p303 = scmp.ne.s32.totalorder %s292, %s295
      %p304 = scmp.eq.s32.totalorder %s25, 3
      %p305 = por %p303, %p304
      %p306 = scmp.ne.s32.totalorder %s295, %s296
      %p307 = scmp.eq.s32.totalorder %s25, 0
      %p308 = por %p306, %p307
      %p309 = scmp.ne.s32.totalorder %s295, %s296
      %p310 = scmp.eq.s32.totalorder %s26, 3
      %p311 = por %p309, %p310
      %p313 = scmp.ne.s32.totalorder %s296, %s312
      %p314 = scmp.eq.s32.totalorder %s26, 0
      %p315 = por %p313, %p314
      %p316 = scmp.le.s32.totalorder 1, %s20
      %p317 = scmp.lt.s32.totalorder %s20, 5
      %p318 = pnand %p316, %p317
      %p319 = pneg %p318
      // Predicated region
      $region9: #{srel_forward.1} parent=5 // pred_check
        _
      $region10: #{srel_forward.1} parent=5 // pred_check_branch
        %321 = sbr.rel (%p318) target = $region12
      $region11: #{srel_forward.1} parent=5 // pred_region
        %s322 = ssub.s32 %s20, 1
        // Predicated region
        $region13: #{srel_forward.1} parent=11 // pred_check
          %p323 = pneg %p58
        $region14: #{srel_forward.1} parent=11 // pred_check_branch
          %325 = sbr.rel (%p323) target = $region16
        $region15: #{srel_forward.1} parent=11 // pred_region
          %p326 = scmp.lt.s32.totalorder %s29, 0
          %s327 = scalar_select %p326, %s29, 0
          %s328 = smul.addr %s327, 2
          %s329 = scalar_lea.vmem %s0, %s328
        $region16: #{srel_forward.1} parent=11 // pred_fallthru
          _
        // Predicated region
        $region17: #{srel_forward.1} parent=11 // pred_check
          %p330 = pneg %p107
        $region18: #{srel_forward.1} parent=11 // pred_check_branch
          %332 = sbr.rel (%p330) target = $region20
        $region19: #{srel_forward.1} parent=11 // pred_region
          _
        $region20: #{srel_forward.1} parent=11 // pred_fallthru
          _
        // Predicated region
        $region21: #{srel_forward.1} parent=11 // pred_check
          %p333 = pneg %p128
        $region22: #{srel_forward.1} parent=11 // pred_check_branch
          %335 = sbr.rel (%p333) target = $region24
        $region23: #{srel_forward.1} parent=11 // pred_region
          _
        $region24: #{srel_forward.1} parent=11 // pred_fallthru
          _
        // Predicated region
        $region25: #{srel_forward.1} parent=11 // pred_check
          %p336 = pneg %p149
        $region26: #{srel_forward.1} parent=11 // pred_check_branch
          %338 = sbr.rel (%p336) target = $region28
        $region27: #{srel_forward.1} parent=11 // pred_region
          _
        $region28: #{srel_forward.1} parent=11 // pred_fallthru
          _
        // Predicated region
        $region29: #{srel_forward.1} parent=11 // pred_check
          %p339 = pneg %p170
        $region30: #{srel_forward.1} parent=11 // pred_check_branch
          %341 = sbr.rel (%p339) target = $region32
        $region31: #{srel_forward.1} parent=11 // pred_region
          _
        $region32: #{srel_forward.1} parent=11 // pred_fallthru
          _
        // Predicated region
        $region33: #{srel_forward.1} parent=11 // pred_check
          %p342 = pneg %p191
        $region34: #{srel_forward.1} parent=11 // pred_check_branch
          %344 = sbr.rel (%p342) target = $region36
        $region35: #{srel_forward.1} parent=11 // pred_region
          _
        $region36: #{srel_forward.1} parent=11 // pred_fallthru
          _
        // Predicated region
        $region37: #{srel_forward.1} parent=11 // pred_check
          %p345 = pneg %p212
        $region38: #{srel_forward.1} parent=11 // pred_check_branch
          %347 = sbr.rel (%p345) target = $region40
        $region39: #{srel_forward.1} parent=11 // pred_region
          _
        $region40: #{srel_forward.1} parent=11 // pred_fallthru
          _
        // Predicated region
        $region41: #{srel_forward.1} parent=11 // pred_check
          %p348 = pneg %p233
        $region42: #{srel_forward.1} parent=11 // pred_check_branch
          %350 = sbr.rel (%p348) target = $region44
        $region43: #{srel_forward.1} parent=11 // pred_region
          _
        $region44: #{srel_forward.1} parent=11 // pred_fallthru
          _
        // Predicated region
        $region45: #{srel_forward.1} parent=11 // pred_check
          %p351 = pneg %p254
        $region46: #{srel_forward.1} parent=11 // pred_check_branch
          %353 = sbr.rel (%p351) target = $region48
        $region47: #{srel_forward.1} parent=11 // pred_region
          _
        $region48: #{srel_forward.1} parent=11 // pred_fallthru
          _
      $region12: #{srel_forward.1} parent=5 // pred_fallthru
        _
      %p354 = scmp.lt.s32.totalorder %s20, 4
      // Predicated region
      $region49: #{srel_forward.1} parent=5 // pred_check
        %p355 = pneg %p354
      $region50: #{srel_forward.1} parent=5 // pred_check_branch
        %357 = sbr.rel (%p355) target = $region52
      $region51: #{srel_forward.1} parent=5 // pred_region
        // Predicated region
        $region53: #{srel_forward.1} parent=51 // pred_check
          %p358 = pneg %p80
        $region54: #{srel_forward.1} parent=51 // pred_check_branch
          %360 = sbr.rel (%p358) target = $region56
        $region55: #{srel_forward.1} parent=51 // pred_region
          %p361 = scmp.lt.s32.totalorder %s28, 3
          %s362 = scalar_select %p361, %s28, 3
          %p363 = scmp.lt.s32.totalorder %s27, 0
          %s364 = scalar_select %p363, %s27, 0
          %s365 = sadd.s32 %s364, %s362
          %s366 = smul.addr %s365, 2
          %s367 = scalar_lea.vmem %s1, %s366
        $region56: #{srel_forward.1} parent=51 // pred_fallthru
          _
      $region52: #{srel_forward.1} parent=5 // pred_fallthru
        _
      %p368 = scmp.le.s32.totalorder 1, %s20
      %p369 = scmp.lt.s32.totalorder %s20, 5
      %p370 = pnand %p368, %p369
      %p371 = pneg %p370
      // Predicated region
      $region57: #{srel_forward.1} parent=5 // pred_check
        _
      $region58: #{srel_forward.1} parent=5 // pred_check_branch
        %373 = sbr.rel (%p370) target = $region60
      $region59: #{srel_forward.1} parent=5 // pred_region
        %s374 = ssub.s32 %s20, 1
        %p375 = scmp.lt.s32.totalorder %s29, 0
        %s376 = scalar_select %p375, %s29, 0
        %s377 = smul.addr %s376, 2
        %s378 = scalar_lea.vmem %s0, %s377
        %p379 = pneg %p58
        %p380 = pneg %p55
        %p381 = scmp.lt.s32.totalorder %s30, 3
        %s382 = scalar_select %p381, %s30, 3
        %p383 = scmp.lt.s32.totalorder %s29, 0
        %s384 = scalar_select %p383, %s29, 0
        %s385 = sadd.s32 %s384, %s382
        %s386 = smul.addr %s385, 2
        %s387 = scalar_lea.vmem %s1, %s386
        %p388 = pneg %p86
        %p389 = pneg %p83
        %p390 = pneg %p107
        %p391 = pneg %p104
        %p392 = pneg %p128
        %p393 = pneg %p125
        %p394 = pneg %p149
        %p395 = pneg %p146
        %p396 = pneg %p170
        %p397 = pneg %p167
        %p398 = pneg %p191
        %p399 = pneg %p188
        %p400 = pneg %p212
        %p401 = pneg %p209
        %p402 = pneg %p233
        %p403 = pneg %p230
        %p404 = pneg %p254
        %p405 = pneg %p251
        %p406 = pneg %p280
        %p407 = pneg %p277
        %p408 = pneg %p308
        %p409 = pneg %p305
        %p410 = scmp.lt.s32.totalorder %s30, 3
        %s411 = scalar_select %p410, %s30, 3
        %p412 = scmp.lt.s32.totalorder %s29, 0
        %s413 = scalar_select %p412, %s29, 0
        %s414 = sadd.s32 %s413, %s411
        %s415 = smul.addr %s414, 2
        %s416 = scalar_lea.vmem %s11, %s415
        %p417 = scmp.lt.s32.totalorder %s29, 0
        %s418 = scalar_select %p417, %s29, 0
        %s419 = smul.addr %s418, 2
        %s420 = scalar_lea.vmem %s0, %s419
        %p421 = scmp.lt.s32.totalorder %s30, 3
        %s422 = scalar_select %p421, %s30, 3
        %p423 = scmp.lt.s32.totalorder %s29, 0
        %s424 = scalar_select %p423, %s29, 0
        %s425 = sadd.s32 %s424, %s422
        %s426 = smul.addr %s425, 2
        %s427 = scalar_lea.vmem %s1, %s426
        %p428 = scmp.lt.s32.totalorder %s30, 3
        %s429 = scalar_select %p428, %s30, 3
        %p430 = scmp.lt.s32.totalorder %s29, 0
        %s431 = scalar_select %p430, %s29, 0
        %s432 = sadd.s32 %s431, %s429
        %s433 = smul.addr %s432, 2
        %s434 = scalar_lea.vmem %s11, %s433
        %p435 = scmp.eq.s32.totalorder %s30, 0
        // Predicated region
        $region61: #{srel_forward.1} parent=59 // pred_check
          %p436 = pneg %p435
        $region62: #{srel_forward.1} parent=59 // pred_check_branch
          %438 = sbr.rel (%p436) target = $region64
        $region63: #{srel_forward.1} parent=59 // pred_region
          %v439 = vld [vmem:[%s420] sm:$0x3]
          %v440 = vand.u32 2147483647, %v439
          %vm441 = vcmp.le.f32.partialorder %v440, 0.7853982
          %vm442 = vcmp.lt.s32.totalorder %v439, 0
          %v443 = vand.u32 %v439, 2139095040
          %v444 = vshrl.u32 %v443, 23
          %v445 = vsub.s32 %v444, 127
          %v446 = vand.u32 2147483647, %v439
          %v447 = vand.u32 %v446, 8388607
          %v448 = vor.u32 %v447, 8388608
          %v449 = vsub.s32 0, %v448
          %v450 = vadd.s32 %v445, 1
          %vm451 = vcmp.gt.s32.totalorder %v450, 0
          %v452 = vsel %vm451, %v450, 0
          %v453 = vshrl.u32 %v452, 5
          %v454 = vand.u32 %v452, 31
          %v455 = vsub.s32 32, %v454
          %v456 = vshrl.u32 683565275, %v455
          %v457 = vshll.u32 683565275, %v454
          %v458 = vshrl.u32 2475754826, %v455
          %v459 = vor.u32 %v457, %v458
          %v460 = vshll.u32 2475754826, %v454
          %v461 = vshrl.u32 2131351028, %v455
          %v462 = vor.u32 %v460, %v461
          %v463 = vshll.u32 2131351028, %v454
          %v464 = vshrl.u32 2102212464, %v455
          %v465 = vor.u32 %v463, %v464
          %v466 = vshll.u32 2102212464, %v454
          %v467 = vshrl.u32 920167782, %v455
          %v468 = vor.u32 %v466, %v467
          %v469 = vshll.u32 920167782, %v454
          %v470 = vshrl.u32 1326507024, %v455
          %v471 = vor.u32 %v469, %v470
          %vm472 = vcmp.lt.s32.totalorder %v453, 1
          %vm473 = vcmp.lt.s32.totalorder %v453, 2
          %vm474 = vcmp.lt.s32.totalorder %v453, 3
          %vm475 = vcmp.lt.s32.totalorder %v453, 4
          %v476 = vsel %vm472, %v456, %v459
          %v477 = vsel %vm475, %v465, 2102212464
          %v478 = vsel %vm474, %v462, %v477
          %v479 = vsel %vm473, %v476, %v478
          %v480 = vsel %vm472, %v459, %v462
          %v481 = vsel %vm475, %v468, 920167782
          %v482 = vsel %vm474, %v465, %v481
          %v483 = vsel %vm473, %v480, %v482
          %v484 = vsel %vm472, %v462, %v465
          %v485 = vsel %vm475, %v471, 1326507024
          %v486 = vsel %vm474, %v468, %v485
          %v487 = vsel %vm473, %v484, %v486
          %v488 = vshll.u32 %v448, 8
          %v489 = vmul.u32.u64.compose %v488, %v487
          %v490 = vextract.low.u32 %v489
          %v491 = vextract.high.u32 %v489
          %v492 = vmul.u32.u64.compose %v488, %v483
          %v493 = vextract.low.u32 %v492
          %v494 = vextract.high.u32 %v492
          %v495 = vmul.u32 %v488, %v479
          %v496 = vadd.s32 %v491, %v493
          %vm497 = vc.u32 %v491, %v493
          %v498 = vadd.s32 %v494, 1
          %v499 = vsel %vm497, %v498, %v494
          %v500 = vadd.s32 %v495, %v499
          %v501 = vadd.s32 %v500, 536870912
          %v502 = vshrl.u32 %v501, 30
          %v503 = vshll.u32 %v502, 30
          %v504 = vsub.s32 %v500, %v503
          %vm505 = vcmp.lt.s32.totalorder %v504, 0
          %v506 = vsub.s32 0, %v504
          %v507 = vsel %vm505, %v506, %v504
          %v508 = vclz %v507
          %v509 = vsub.s32 %v508, 2
          %vm510 = vcmp.gt.s32.totalorder 0, %v509
          %v511 = vsel %vm510, 0, %v509
          %v512 = vsub.s32 32, %v511
          %v513 = vshll.u32 %v504, %v511
          %v514 = vshrl.u32 %v496, %v512
          %v515 = vor.u32 %v513, %v514
          %v516 = vsub.s32 4294967266, %v511
          %v517 = vadd.s32 %v516, 127
          %v518 = vshll.u32 %v517, 23
          %v519 = vor.u32 4788187, %v518
          %v520 = vand.u32 2147483647, %v519
          %v522 = vcvt.s32.f32 %v515
          %v523 = vmul.f32 %v522, %v520
          %v524 = vxor.u32 %v523, 2147483648
          %v525 = vsel %vm442, %v524, %v523
          %v526 = vsub.s32 4, %v502
          %v527 = vsel %vm442, %v526, %v502
          %v528 = vsel %vm441, %v439, %v525
          %v529 = vsel %vm441, 0, %v527
          %v530 = vcosq.f32.pop %v528
          %v531 = vsinq.f32.pop %v528
          %vm532 = vweird.f32 %v439
          %v533 = vand.u32 %v529, 3
          %vm534 = vcmp.lt.s32.totalorder %v533, 2
          %vm535 = vcmp.eq.s32.totalorder %v533, 0
          %v536 = vxor.u32 %v531, 2147483648
          %v537 = vsel %vm535, %v530, %v536
          %vm538 = vcmp.eq.s32.totalorder %v533, 2
          %v539 = vxor.u32 %v530, 2147483648
          %v540 = vsel %vm538, %v539, %v531
          %v541 = vsel %vm534, %v537, %v540
          %v542 = vsel %vm532, nan, %v541
          %v543 = vmul.f32 %v542, 0.35355338
          %v544 = vand.u32 2147483647, %v439
          %vm545 = vcmp.le.f32.partialorder %v544, 0.7853982
          %vm546 = vcmp.lt.s32.totalorder %v439, 0
          %v547 = vand.u32 %v439, 2139095040
          %v548 = vshrl.u32 %v547, 23
          %v549 = vsub.s32 %v548, 127
          %v550 = vand.u32 2147483647, %v439
          %v551 = vand.u32 %v550, 8388607
          %v552 = vor.u32 %v551, 8388608
          %v553 = vsub.s32 0, %v552
          %v554 = vadd.s32 %v549, 1
          %vm555 = vcmp.gt.s32.totalorder %v554, 0
          %v556 = vsel %vm555, %v554, 0
          %v557 = vshrl.u32 %v556, 5
          %v558 = vand.u32 %v556, 31
          %v559 = vsub.s32 32, %v558
          %v560 = vshrl.u32 683565275, %v559
          %v561 = vshll.u32 683565275, %v558
          %v562 = vshrl.u32 2475754826, %v559
          %v563 = vor.u32 %v561, %v562
          %v564 = vshll.u32 2475754826, %v558
          %v565 = vshrl.u32 2131351028, %v559
          %v566 = vor.u32 %v564, %v565
          %v567 = vshll.u32 2131351028, %v558
          %v568 = vshrl.u32 2102212464, %v559
          %v569 = vor.u32 %v567, %v568
          %v570 = vshll.u32 2102212464, %v558
          %v571 = vshrl.u32 920167782, %v559
          %v572 = vor.u32 %v570, %v571
          %v573 = vshll.u32 920167782, %v558
          %v574 = vshrl.u32 1326507024, %v559
          %v575 = vor.u32 %v573, %v574
          %vm576 = vcmp.lt.s32.totalorder %v557, 1
          %vm577 = vcmp.lt.s32.totalorder %v557, 2
          %vm578 = vcmp.lt.s32.totalorder %v557, 3
          %vm579 = vcmp.lt.s32.totalorder %v557, 4
          %v580 = vsel %vm576, %v560, %v563
          %v581 = vsel %vm579, %v569, 2102212464
          %v582 = vsel %vm578, %v566, %v581
          %v583 = vsel %vm577, %v580, %v582
          %v584 = vsel %vm576, %v563, %v566
          %v585 = vsel %vm579, %v572, 920167782
          %v586 = vsel %vm578, %v569, %v585
          %v587 = vsel %vm577, %v584, %v586
          %v588 = vsel %vm576, %v566, %v569
          %v589 = vsel %vm579, %v575, 1326507024
          %v590 = vsel %vm578, %v572, %v589
          %v591 = vsel %vm577, %v588, %v590
          %v592 = vshll.u32 %v552, 8
          %v593 = vmul.u32.u64.compose %v592, %v591
          %v594 = vextract.low.u32 %v593
          %v595 = vextract.high.u32 %v593
          %v596 = vmul.u32.u64.compose %v592, %v587
          %v597 = vextract.low.u32 %v596
          %v598 = vextract.high.u32 %v596
          %v599 = vmul.u32 %v592, %v583
          %v600 = vadd.s32 %v595, %v597
          %vm601 = vc.u32 %v595, %v597
          %v602 = vadd.s32 %v598, 1
          %v603 = vsel %vm601, %v602, %v598
          %v604 = vadd.s32 %v599, %v603
          %v605 = vadd.s32 %v604, 536870912
          %v606 = vshrl.u32 %v605, 30
          %v607 = vshll.u32 %v606, 30
          %v608 = vsub.s32 %v604, %v607
          %vm609 = vcmp.lt.s32.totalorder %v608, 0
          %v610 = vsub.s32 0, %v608
          %v611 = vsel %vm609, %v610, %v608
          %v612 = vclz %v611
          %v613 = vsub.s32 %v612, 2
          %vm614 = vcmp.gt.s32.totalorder 0, %v613
          %v615 = vsel %vm614, 0, %v613
          %v616 = vsub.s32 32, %v615
          %v617 = vshll.u32 %v608, %v615
          %v618 = vshrl.u32 %v600, %v616
          %v619 = vor.u32 %v617, %v618
          %v620 = vsub.s32 4294967266, %v615
          %v621 = vadd.s32 %v620, 127
          %v622 = vshll.u32 %v621, 23
          %v623 = vor.u32 4788187, %v622
          %v624 = vand.u32 2147483647, %v623
          %v626 = vcvt.s32.f32 %v619
          %v627 = vmul.f32 %v626, %v624
          %v628 = vxor.u32 %v627, 2147483648
          %v629 = vsel %vm546, %v628, %v627
          %v630 = vsub.s32 4, %v606
          %v631 = vsel %vm546, %v630, %v606
          %v632 = vsel %vm545, %v439, %v629
          %v633 = vsel %vm545, 0, %v631
          %v634 = vcosq.f32.pop %v632
          %v635 = vsinq.f32.pop %v632
          %vm636 = vweird.f32 %v439
          %v637 = vadd.s32 %v633, 3
          %v638 = vand.u32 %v637, 3
          %vm639 = vcmp.lt.s32.totalorder %v638, 2
          %vm640 = vcmp.eq.s32.totalorder %v638, 0
          %v641 = vxor.u32 %v635, 2147483648
          %v642 = vsel %vm640, %v634, %v641
          %vm643 = vcmp.eq.s32.totalorder %v638, 2
          %v644 = vxor.u32 %v634, 2147483648
          %v645 = vsel %vm643, %v644, %v635
          %v646 = vsel %vm639, %v642, %v645
          %v647 = vsel %vm636, nan, %v646
          %v648 = vmul.f32 %v647, 0.35355338
          %v649 = vld [vmem:[%s2] sm:$0xff]
          %v650 = vld [vmem:[%s3] sm:$0xff]
          %vm651 = vcmask 64512
          %v653 = vsel %vm651, %v648, 0
          %655 = vmatprep.subr.mxu0 0.0
          %656 = vmatpush1.msra.mxu0 %v650
          %657 = vmatprep.subr.mxu0 0.0
          %658 = vmatpush1.msra.mxu0 0.0
          %659 = vmatprep.subr.mxu0 0.0
          %660 = vmatpush1.msra.mxu0 0.0
          %661 = vmatprep.subr.mxu0 0.0
          %662 = vmatpush1.msra.mxu0 0.0
          %663 = vmatprep.subr.mxu0 0.0
          %664 = vmatpush1.msra.mxu0 0.0
          %665 = vmatprep.subr.mxu0 0.0
          %666 = vmatpush1.msra.mxu0 0.0
          %667 = vmatprep.subr.mxu0 0.0
          %668 = vmatpush1.msra.mxu0 0.0
          %669 = vmatprep.subr.mxu0 0.0
          %670 = vmatpush1.msra.mxu0 0.0
          %671 = vmatprep.subr.mxu0 0.0
          %672 = vmatpush1.msra.mxu0 0.0
          %673 = vmatprep.subr.mxu0 0.0
          %674 = vmatpush1.msra.mxu0 0.0
          %675 = vmatprep.subr.mxu0 0.0
          %676 = vmatpush1.msra.mxu0 0.0
          %677 = vmatprep.subr.mxu0 0.0
          %678 = vmatpush1.msra.mxu0 0.0
          %679 = vmatprep.subr.mxu0 0.0
          %680 = vmatpush1.msra.mxu0 0.0
          %681 = vmatprep.subr.mxu0 0.0
          %682 = vmatpush1.msra.mxu0 0.0
          %683 = vmatprep.subr.mxu0 0.0
          %684 = vmatpush1.msra.mxu0 0.0
          %685 = vmatprep.subr.mxu0 0.0
          %686 = vmatpush1.msra.mxu0 0.0
          %687 = vmatprep.subr.mxu0 0.0
          %688 = vmatpush1.msra.mxu0 0.0
          %689 = vmatprep.subr.mxu0 0.0
          %690 = vmatpush1.msra.mxu0 0.0
          %691 = vmatprep.subr.mxu0 0.0
          %692 = vmatpush1.msra.mxu0 0.0
          %693 = vmatprep.subr.mxu0 0.0
          %694 = vmatpush1.msra.mxu0 0.0
          %695 = vmatprep.subr.mxu0 0.0
          %696 = vmatpush1.msra.mxu0 0.0
          %697 = vmatprep.subr.mxu0 0.0
          %698 = vmatpush1.msra.mxu0 0.0
          %699 = vmatprep.subr.mxu0 0.0
          %700 = vmatpush1.msra.mxu0 0.0
          %701 = vmatprep.subr.mxu0 0.0
          %702 = vmatpush1.msra.mxu0 0.0
          %703 = vmatprep.subr.mxu0 0.0
          %704 = vmatpush1.msra.mxu0 0.0
          %705 = vmatprep.subr.mxu0 0.0
          %706 = vmatpush1.msra.mxu0 0.0
          %707 = vmatprep.subr.mxu0 0.0
          %708 = vmatpush1.msra.mxu0 0.0
          %709 = vmatprep.subr.mxu0 0.0
          %710 = vmatpush1.msra.mxu0 0.0
          %711 = vmatprep.subr.mxu0 0.0
          %712 = vmatpush1.msra.mxu0 0.0
          %713 = vmatprep.subr.mxu0 0.0
          %714 = vmatpush1.msra.mxu0 0.0
          %715 = vmatprep.subr.mxu0 0.0
          %716 = vmatpush1.msra.mxu0 0.0
          %717 = vmatprep.subr.mxu0 0.0
          %718 = vmatpush1.msra.mxu0 0.0
          %719 = vmatprep.mubr.f32.mxu0 0.0
          %720 = vmatmul.mubr.f32.gmra.mrb[0].mxu0 %v653
          %v721 = vpop.f32.mrb[0].mxu0
          %v722 = vadd.f32 0.0, %v721
          %v723 = vpop.f32.mrb[0].mxu0
          %724 = vdwg.mxu0
          %v726 = vsel %vm651, %v543, 0
          %728 = vmatprep.subr.mxu0 0.0
          %729 = vmatpush1.msra.mxu0 %v649
          %730 = vmatprep.subr.mxu0 0.0
          %731 = vmatpush1.msra.mxu0 0.0
          %732 = vmatprep.subr.mxu0 0.0
          %733 = vmatpush1.msra.mxu0 0.0
          %734 = vmatprep.subr.mxu0 0.0
          %735 = vmatpush1.msra.mxu0 0.0
          %736 = vmatprep.subr.mxu0 0.0
          %737 = vmatpush1.msra.mxu0 0.0
          %738 = vmatprep.subr.mxu0 0.0
          %739 = vmatpush1.msra.mxu0 0.0
          %740 = vmatprep.subr.mxu0 0.0
          %741 = vmatpush1.msra.mxu0 0.0
          %742 = vmatprep.subr.mxu0 0.0
          %743 = vmatpush1.msra.mxu0 0.0
          %744 = vmatprep.subr.mxu0 0.0
          %745 = vmatpush1.msra.mxu0 0.0
          %746 = vmatprep.subr.mxu0 0.0
          %747 = vmatpush1.msra.mxu0 0.0
          %748 = vmatprep.subr.mxu0 0.0
          %749 = vmatpush1.msra.mxu0 0.0
          %750 = vmatprep.subr.mxu0 0.0
          %751 = vmatpush1.msra.mxu0 0.0
          %752 = vmatprep.subr.mxu0 0.0
          %753 = vmatpush1.msra.mxu0 0.0
          %754 = vmatprep.subr.mxu0 0.0
          %755 = vmatpush1.msra.mxu0 0.0
          %756 = vmatprep.subr.mxu0 0.0
          %757 = vmatpush1.msra.mxu0 0.0
          %758 = vmatprep.subr.mxu0 0.0
          %759 = vmatpush1.msra.mxu0 0.0
          %760 = vmatprep.subr.mxu0 0.0
          %761 = vmatpush1.msra.mxu0 0.0
          %762 = vmatprep.subr.mxu0 0.0
          %763 = vmatpush1.msra.mxu0 0.0
          %764 = vmatprep.subr.mxu0 0.0
          %765 = vmatpush1.msra.mxu0 0.0
          %766 = vmatprep.subr.mxu0 0.0
          %767 = vmatpush1.msra.mxu0 0.0
          %768 = vmatprep.subr.mxu0 0.0
          %769 = vmatpush1.msra.mxu0 0.0
          %770 = vmatprep.subr.mxu0 0.0
          %771 = vmatpush1.msra.mxu0 0.0
          %772 = vmatprep.subr.mxu0 0.0
          %773 = vmatpush1.msra.mxu0 0.0
          %774 = vmatprep.subr.mxu0 0.0
          %775 = vmatpush1.msra.mxu0 0.0
          %776 = vmatprep.subr.mxu0 0.0
          %777 = vmatpush1.msra.mxu0 0.0
          %778 = vmatprep.subr.mxu0 0.0
          %779 = vmatpush1.msra.mxu0 0.0
          %780 = vmatprep.subr.mxu0 0.0
          %781 = vmatpush1.msra.mxu0 0.0
          %782 = vmatprep.subr.mxu0 0.0
          %783 = vmatpush1.msra.mxu0 0.0
          %784 = vmatprep.subr.mxu0 0.0
          %785 = vmatpush1.msra.mxu0 0.0
          %786 = vmatprep.subr.mxu0 0.0
          %787 = vmatpush1.msra.mxu0 0.0
          %788 = vmatprep.subr.mxu0 0.0
          %789 = vmatpush1.msra.mxu0 0.0
          %790 = vmatprep.subr.mxu0 0.0
          %791 = vmatpush1.msra.mxu0 0.0
          %792 = vmatprep.mubr.f32.mxu0 0.0
          %793 = vmatmul.mubr.f32.gmra.mrb[0].mxu0 %v726
          %v794 = vpop.f32.mrb[0].mxu0
          %v795 = vadd.f32 %v722, %v794
          %v796 = vpop.f32.mrb[0].mxu0
          %797 = vdwg.mxu0
          %vm798 = vcmask 517120
          %799 = vst.msk [vmem:[#allocation2] sm:$0x3] %vm798, %v795
          %vm800 = vcmask 58368
          %801 = vst.msk [vmem:[#allocation4] sm:$0x3] %vm800, %v439
        $region64: #{srel_forward.1} parent=59 // pred_fallthru
          _
        %v802 = vld [vmem:[%s427] sm:$0x3]
        %v803 = vld [vmem:[%s4] sm:$0xff]
        %v804 = vld [vmem:[%s4 + $0x8] sm:$0xff]
        %v805 = vld [vmem:[#allocation2] sm:$0x3]
        %vm806 = vcmask 130048
        %v808 = vsel %vm806, %v802, 0
        %810 = vmatprep.subr.mxu0 0.0
        %811 = vmatpush1.msra.mxu0 %v803
        %812 = vmatprep.subr.mxu0 0.0
        %813 = vmatpush1.msra.mxu0 %v804
        %814 = vmatprep.subr.mxu0 0.0
        %815 = vmatpush1.msra.mxu0 0.0
        %816 = vmatprep.subr.mxu0 0.0
        %817 = vmatpush1.msra.mxu0 0.0
        %818 = vmatprep.subr.mxu0 0.0
        %819 = vmatpush1.msra.mxu0 0.0
        %820 = vmatprep.subr.mxu0 0.0
        %821 = vmatpush1.msra.mxu0 0.0
        %822 = vmatprep.subr.mxu0 0.0
        %823 = vmatpush1.msra.mxu0 0.0
        %824 = vmatprep.subr.mxu0 0.0
        %825 = vmatpush1.msra.mxu0 0.0
        %826 = vmatprep.subr.mxu0 0.0
        %827 = vmatpush1.msra.mxu0 0.0
        %828 = vmatprep.subr.mxu0 0.0
        %829 = vmatpush1.msra.mxu0 0.0
        %830 = vmatprep.subr.mxu0 0.0
        %831 = vmatpush1.msra.mxu0 0.0
        %832 = vmatprep.subr.mxu0 0.0
        %833 = vmatpush1.msra.mxu0 0.0
        %834 = vmatprep.subr.mxu0 0.0
        %835 = vmatpush1.msra.mxu0 0.0
        %836 = vmatprep.subr.mxu0 0.0
        %837 = vmatpush1.msra.mxu0 0.0
        %838 = vmatprep.subr.mxu0 0.0
        %839 = vmatpush1.msra.mxu0 0.0
        %840 = vmatprep.subr.mxu0 0.0
        %841 = vmatpush1.msra.mxu0 0.0
        %842 = vmatprep.subr.mxu0 0.0
        %843 = vmatpush1.msra.mxu0 0.0
        %844 = vmatprep.subr.mxu0 0.0
        %845 = vmatpush1.msra.mxu0 0.0
        %846 = vmatprep.subr.mxu0 0.0
        %847 = vmatpush1.msra.mxu0 0.0
        %848 = vmatprep.subr.mxu0 0.0
        %849 = vmatpush1.msra.mxu0 0.0
        %850 = vmatprep.subr.mxu0 0.0
        %851 = vmatpush1.msra.mxu0 0.0
        %852 = vmatprep.subr.mxu0 0.0
        %853 = vmatpush1.msra.mxu0 0.0
        %854 = vmatprep.subr.mxu0 0.0
        %855 = vmatpush1.msra.mxu0 0.0
        %856 = vmatprep.subr.mxu0 0.0
        %857 = vmatpush1.msra.mxu0 0.0
        %858 = vmatprep.subr.mxu0 0.0
        %859 = vmatpush1.msra.mxu0 0.0
        %860 = vmatprep.subr.mxu0 0.0
        %861 = vmatpush1.msra.mxu0 0.0
        %862 = vmatprep.subr.mxu0 0.0
        %863 = vmatpush1.msra.mxu0 0.0
        %864 = vmatprep.subr.mxu0 0.0
        %865 = vmatpush1.msra.mxu0 0.0
        %866 = vmatprep.subr.mxu0 0.0
        %867 = vmatpush1.msra.mxu0 0.0
        %868 = vmatprep.subr.mxu0 0.0
        %869 = vmatpush1.msra.mxu0 0.0
        %870 = vmatprep.subr.mxu0 0.0
        %871 = vmatpush1.msra.mxu0 0.0
        %872 = vmatprep.subr.mxu0 0.0
        %873 = vmatpush1.msra.mxu0 0.0
        %874 = vmatprep.mubr.f32.mxu0 0.0
        %875 = vmatmul.mubr.f32.gmra.mrb[0].mxu0 %v808
        %v876 = vpop.f32.mrb[0].mxu0
        %v877 = vadd.f32 %v805, %v876
        %v878 = vpop.f32.mrb[0].mxu0
        %879 = vdwg.mxu0
        %s880 = scalar_lea.vmem %s5, %s30
        %v881 = vld [vmem:[%s880] sm:$0x1]
        %v882 = vlaneseq
        %v883 = vshrl.u32 %v882, 7
        %v884 = vsub.s32 0, %v883
        %v885 = vrot.slane %v881, %v884
        %v886 = vadd.f32 %v877, %v885
        %v887 = vmax.f32 %v886, 0.0
        %v888 = vld [vmem:[%s6] sm:$0xff]
        %v889 = vld [vmem:[%s6 + $0x8] sm:$0xff]
        %v890 = vld [vmem:[%s6 + $0x10] sm:$0xff]
        %v891 = vld [vmem:[%s6 + $0x18] sm:$0xff]
        %v892 = vld [vmem:[%s6 + $0x20] sm:$0xff]
        %v893 = vld [vmem:[%s6 + $0x28] sm:$0xff]
        %v894 = vld [vmem:[%s6 + $0x30] sm:$0xff]
        %v895 = vld [vmem:[%s6 + $0x38] sm:$0xff]
        %v896 = vld [vmem:[%s7] sm:$0x1]
        %v898 = vlaneseq
        %v899 = vshrl.u32 %v898, 7
        %v900 = vsub.s32 0, %v899
        %v901 = vrot.slane %v896, %v900
        %vm903 = vcmask 523264
        %v905 = vsel %vm903, %v887, 0
        %907 = vmatprep.subr.mxu0 0.0
        %908 = vmatpush1.msra.mxu0 %v888
        %909 = vmatprep.subr.mxu0 0.0
        %910 = vmatpush1.msra.mxu0 %v889
        %911 = vmatprep.subr.mxu0 0.0
        %912 = vmatpush1.msra.mxu0 %v890
        %913 = vmatprep.subr.mxu0 0.0
        %914 = vmatpush1.msra.mxu0 %v891
        %915 = vmatprep.subr.mxu0 0.0
        %916 = vmatpush1.msra.mxu0 %v892
        %917 = vmatprep.subr.mxu0 0.0
        %918 = vmatpush1.msra.mxu0 %v893
        %919 = vmatprep.subr.mxu0 0.0
        %920 = vmatpush1.msra.mxu0 %v894
        %921 = vmatprep.subr.mxu0 0.0
        %922 = vmatpush1.msra.mxu0 %v895
        %923 = vmatprep.subr.mxu0 0.0
        %924 = vmatpush1.msra.mxu0 0.0
        %925 = vmatprep.subr.mxu0 0.0
        %926 = vmatpush1.msra.mxu0 0.0
        %927 = vmatprep.subr.mxu0 0.0
        %928 = vmatpush1.msra.mxu0 0.0
        %929 = vmatprep.subr.mxu0 0.0
        %930 = vmatpush1.msra.mxu0 0.0
        %931 = vmatprep.subr.mxu0 0.0
        %932 = vmatpush1.msra.mxu0 0.0
        %933 = vmatprep.subr.mxu0 0.0
        %934 = vmatpush1.msra.mxu0 0.0
        %935 = vmatprep.subr.mxu0 0.0
        %936 = vmatpush1.msra.mxu0 0.0
        %937 = vmatprep.subr.mxu0 0.0
        %938 = vmatpush1.msra.mxu0 0.0
        %939 = vmatprep.subr.mxu0 0.0
        %940 = vmatpush1.msra.mxu0 0.0
        %941 = vmatprep.subr.mxu0 0.0
        %942 = vmatpush1.msra.mxu0 0.0
        %943 = vmatprep.subr.mxu0 0.0
        %944 = vmatpush1.msra.mxu0 0.0
        %945 = vmatprep.subr.mxu0 0.0
        %946 = vmatpush1.msra.mxu0 0.0
        %947 = vmatprep.subr.mxu0 0.0
        %948 = vmatpush1.msra.mxu0 0.0
        %949 = vmatprep.subr.mxu0 0.0
        %950 = vmatpush1.msra.mxu0 0.0
        %951 = vmatprep.subr.mxu0 0.0
        %952 = vmatpush1.msra.mxu0 0.0
        %953 = vmatprep.subr.mxu0 0.0
        %954 = vmatpush1.msra.mxu0 0.0
        %955 = vmatprep.subr.mxu0 0.0
        %956 = vmatpush1.msra.mxu0 0.0
        %957 = vmatprep.subr.mxu0 0.0
        %958 = vmatpush1.msra.mxu0 0.0
        %959 = vmatprep.subr.mxu0 0.0
        %960 = vmatpush1.msra.mxu0 0.0
        %961 = vmatprep.subr.mxu0 0.0
        %962 = vmatpush1.msra.mxu0 0.0
        %963 = vmatprep.subr.mxu0 0.0
        %964 = vmatpush1.msra.mxu0 0.0
        %965 = vmatprep.subr.mxu0 0.0
        %966 = vmatpush1.msra.mxu0 0.0
        %967 = vmatprep.subr.mxu0 0.0
        %968 = vmatpush1.msra.mxu0 0.0
        %969 = vmatprep.subr.mxu0 0.0
        %970 = vmatpush1.msra.mxu0 0.0
        %971 = vmatprep.mubr.f32.mxu0 0.0
        %972 = vmatmul.mubr.f32.gmra.mrb[0].mxu0 %v905
        %v973 = vpop.f32.mrb[0].mxu0
        %v974 = vadd.f32 %v901, %v973
        %v975 = vpop.f32.mrb[0].mxu0
        %976 = vdwg.mxu0
        %v977 = vld [vmem:[%s8] sm:$0x1]
        %v979 = vlaneseq
        %v980 = vshrl.u32 %v979, 7
        %v981 = vsub.s32 0, %v980
        %v982 = vrot.slane %v977, %v981
        %v984 = vmul.f32 %v887, %v982
        %vm985 = vcmask 517120
        %v986 = vsel %vm985, %v984, 0.0
        %987 = vadd.xlane.f32.xlu0 %v986
        %v988 = vpop.xlane.xlu0 %987
        %s989 = sld [smem:[#allocation3]]
        %v990 = vstv %s989
        %v991 = vadd.f32 %v988, %v990
        %vm992 = vcmask 58368
        %993 = vst.msk [vmem:[%s434] sm:$0x3] %vm992, %v974
        %v994 = vld [vmem:[#allocation4] sm:$0x3]
        %v995 = vmul.f32 %v991, %v974
        %v996 = vsub.f32 %v994, %v995
        %997 = vst.msk [vmem:[#allocation4] sm:$0x3] %vm992, %v996
        %p998 = scmp.lt.s32.totalorder %s30, 3
        %s999 = scalar_select %p998, %s30, 3
        %p1000 = scmp.lt.s32.totalorder %s29, 0
        %s1001 = scalar_select %p1000, %s29, 0
        %s1002 = sadd.s32 %s1001, %s999
        %s1003 = smul.addr %s1002, 2
        %s1004 = scalar_lea.vmem %s11, %s1003
        // Predicated region
        $region65: #{srel_forward.1} parent=59 // pred_check
          %p1005 = pneg %p277
        $region66: #{srel_forward.1} parent=59 // pred_check_branch
          %1007 = sbr.rel (%p1005) target = $region68
        $region67: #{srel_forward.1} parent=59 // pred_region
          %s1009 = ssub.s32 32, 32
          %1010 = vsyncadd [#allocation5], %s1009
          %s1011 = smul.addr %s29, 32
          %s1012 = scalar_lea.hbm %s10, %s1011
          %s1014 = sshll.u32 [#allocation4], 4
          %s1015 = int_to_ptr.vmem [resolvable:$true] %s1014
          %1017 = dma.vmem_to_hbm [thread:$0]  %s1015, 32, %s1012, [#allocation5]
        $region68: #{srel_forward.1} parent=59 // pred_fallthru
          _
        // Predicated region
        $region69: #{srel_forward.1} parent=59 // pred_check
          %p1018 = pneg %p305
        $region70: #{srel_forward.1} parent=59 // pred_check_branch
          %1020 = sbr.rel (%p1018) target = $region72
        $region71: #{srel_forward.1} parent=59 // pred_region
          _
        $region72: #{srel_forward.1} parent=59 // pred_fallthru
          _
        // Predicated region
        $region73: #{srel_forward.1} parent=59 // pred_check
          %p1021 = pneg %p277
        $region74: #{srel_forward.1} parent=59 // pred_check_branch
          %1023 = sbr.rel (%p1021) target = $region76
        $region75: #{srel_forward.1} parent=59 // pred_region
          %1024 = dma.done [#allocation5], 32
        $region76: #{srel_forward.1} parent=59 // pred_fallthru
          _
      $region60: #{srel_forward.1} parent=5 // pred_fallthru
        _
      %p1025 = scmp.le.s32.totalorder 2, %s20
      // Predicated region
      $region77: #{srel_forward.1} parent=5 // pred_check
        %p1026 = pneg %p1025
      $region78: #{srel_forward.1} parent=5 // pred_check_branch
        %1028 = sbr.rel (%p1026) target = $region80
      $region79: #{srel_forward.1} parent=5 // pred_region
        %s1029 = ssub.s32 %s20, 2
        // Predicated region
        $region81: #{srel_forward.1} parent=79 // pred_check
          %p1030 = pneg %p311
        $region82: #{srel_forward.1} parent=79 // pred_check_branch
          %1032 = sbr.rel (%p1030) target = $region84
        $region83: #{srel_forward.1} parent=79 // pred_region
          %p1033 = scmp.lt.s32.totalorder %s32, 3
          %s1034 = scalar_select %p1033, %s32, 3
          %p1035 = scmp.lt.s32.totalorder %s31, 0
          %s1036 = scalar_select %p1035, %s31, 0
          %s1037 = sadd.s32 %s1036, %s1034
          %s1038 = smul.addr %s1037, 2
          %s1039 = scalar_lea.vmem %s11, %s1038
        $region84: #{srel_forward.1} parent=79 // pred_fallthru
          _
      $region80: #{srel_forward.1} parent=5 // pred_fallthru
        _
    $region6: #{srel_forward.1} parent=1 // loop_footer
      %s24 = sadd.s32 1, %s20
    $region7: #{srel_forward.1} parent=1 // loop_footer_branch
      %19 = sbr.rel target = $region3
    $region8: #{srel_forward.1} parent=1 // loop_exit
      _
    %1040 = vsyncpa [#allocation5], 1
    %s1041 = scalar_lea.sflag [#allocation5], 1
    %1042 = vsyncpa %s1041, 1

</llo_original>
